<compile_context>
chip_gen: v7x
topology: tpu7x:2x2x1
jax: 0.10.0
libtpu: 0.0.40
codegen_flags: <defaults>
</compile_context>

<pallas_src>
import functools

import jax
import jax.numpy as jnp
from jax.experimental import pallas as pl
from jax.experimental.pallas import tpu as pltpu

VEC_LEN = 50
OUT_LEN = 5 * VEC_LEN   # 250
K_PAD = 64              # contraction dim padded to a clean f32 sublane tile
N_PAD = 256             # output dim padded to a lane-dense multiple of 128


def _round_up(n, m):
    return (n + m - 1) // m * m


def _linear_kernel(x_ref, w_ref, b_ref, o_ref):
    # x: (b_tile, K_PAD)  w: (K_PAD, N_PAD)  b: (1, N_PAD)  o: (b_tile, N_PAD)
    # Weight arrives already transposed/padded, so this is a straight MXU matmul
    # with f32 accumulation; bias broadcast-add is a VPU op on lane-dense vregs.
    y = jnp.dot(x_ref[...], w_ref[...], preferred_element_type=jnp.float32)
    o_ref[...] = (y + b_ref[...].astype(jnp.float32)).astype(o_ref.dtype)


def prepare_params(weight, bias):
    """One-time param prep (outside the hot path).

    nn.Linear stores weight as (OUT, IN); transpose to (IN, OUT) and zero-pad to
    (K_PAD, N_PAD). Bias becomes (1, N_PAD). Zero padding does not change the
    matmul/bias result on the un-padded columns.
    """
    w_t = jnp.pad(weight.T, ((0, K_PAD - VEC_LEN), (0, N_PAD - OUT_LEN)))
    b_p = jnp.pad(bias.reshape(1, OUT_LEN), ((0, 0), (0, N_PAD - OUT_LEN)))
    return w_t, b_p


@functools.partial(jax.jit, static_argnames=("b_tile",))
def nn_action_forward(x, w_prepped, b_prepped, *, b_tile=None):
    """Pallas equivalent of NNAction.forward: y = x @ W.T + b."""
    B = x.shape[0]
    if b_tile is None:
        # Small batches: a single sublane-aligned tile. Large batches: 512-row
        # tiles give DMA/compute overlap; x/out tiles are <1 MiB each in f32,
        # comfortably within v7x's 64 MiB VMEM even double-buffered.
        b_tile = min(_round_up(B, 8), 512)
    B_pad = _round_up(B, b_tile)

    # Zero-pad batch rows and the contraction dim for unmasked, vreg-aligned access.
    x_p = jnp.pad(x, ((0, B_pad - B), (0, K_PAD - VEC_LEN)))

    num_tiles = B_pad // b_tile
    flops = 2 * B_pad * K_PAD * N_PAD
    bytes_accessed = (
        x_p.size * x_p.dtype.itemsize
        + w_prepped.size * w_prepped.dtype.itemsize
        + b_prepped.size * b_prepped.dtype.itemsize
        + B_pad * N_PAD * x.dtype.itemsize
    )

    out = pl.pallas_call(
        _linear_kernel,
        out_shape=jax.ShapeDtypeStruct((B_pad, N_PAD), x.dtype),
        grid=(num_tiles,),
        in_specs=[
            pl.BlockSpec((b_tile, K_PAD), lambda i: (i, 0)),   # x tile marches over B
            pl.BlockSpec((K_PAD, N_PAD), lambda i: (0, 0)),    # weight resident
            pl.BlockSpec((1, N_PAD), lambda i: (0, 0)),        # bias resident
        ],
        out_specs=pl.BlockSpec((b_tile, N_PAD), lambda i: (i, 0)),
        compiler_params=pltpu.CompilerParams(
            # Batch tiles are independent -> shards across v7x's 2 TensorCores;
            # harmless no-op on single-TC v5e/v6e.
            dimension_semantics=("parallel",),
        ),
        cost_estimate=pl.CostEstimate(
            flops=flops, transcendentals=0, bytes_accessed=bytes_accessed),
    )(x_p, w_prepped, b_prepped)

    # Strip padding: rows beyond B and output columns 250:256.
    return out[:B, :OUT_LEN]


def init_params(key):
    """Deterministic init mirroring torch.nn.Linear default (uniform +/- 1/sqrt(fan_in))."""
    k_w, k_b = jax.random.split(key)
    bound = 1.0 / jnp.sqrt(jnp.float32(VEC_LEN))
    weight = jax.random.uniform(
        k_w, (OUT_LEN, VEC_LEN), dtype=jnp.float32, minval=-bound, maxval=bound
    )
    bias = jax.random.uniform(
        k_b, (OUT_LEN,), dtype=jnp.float32, minval=-bound, maxval=bound
    )
    return weight, bias


if __name__ == "__main__":
    key = jax.random.PRNGKey(0)
    k_params, k_x = jax.random.split(key)

    weight, bias = init_params(k_params)
    w_prepped, b_prepped = prepare_params(weight, bias)   # done once, not per call

    B = 2
    x = jax.random.normal(k_x, (B, VEC_LEN), dtype=jnp.float32)

    y = nn_action_forward(x, w_prepped, b_prepped)
    y = jax.block_until_ready(y)

    # Reference check in plain JAX (same math as torch.nn.Linear).
    y_ref = x @ weight.T + bias
    assert y.shape == (B, OUT_LEN)
    assert jnp.allclose(y, y_ref, atol=1e-5, rtol=1e-5)

    print("KERNEL_OK")
</pallas_src>

<mosaic_0001>
module attributes {stable_mosaic.version = 11 : i64} {
  func.func @_linear_kernel(%arg0: i32, %arg1: memref<8x64xf32, #tpu.memory_space<vmem>>, %arg2: memref<64x256xf32, #tpu.memory_space<vmem>>, %arg3: memref<1x256xf32, #tpu.memory_space<vmem>>, %arg4: memref<8x256xf32, #tpu.memory_space<vmem>>) attributes {dimension_semantics = [#tpu.dimension_semantics<parallel>], iteration_bounds = array<i64: 1>, scalar_prefetch = 0 : i64, scratch_operands = 0 : i64, tpu.core_type = #tpu.core_type<tc>, window_params = [{transform_indices = @transform_0, window_bounds = array<i64: 8, 64>}, {pipeline_mode = #tpu.pipeline_mode<synchronous>, transform_indices = @transform_1, window_bounds = array<i64: 64, 256>}, {pipeline_mode = #tpu.pipeline_mode<synchronous>, transform_indices = @transform_2, window_bounds = array<i64: 1, 256>}, {transform_indices = @transform_3, window_bounds = array<i64: 8, 256>}]} {
    %c0 = arith.constant 0 : index
    %c0_0 = arith.constant 0 : index
    %0 = vector.load %arg1[%c0, %c0_0] : memref<8x64xf32, #tpu.memory_space<vmem>>, vector<8x64xf32>
    %c0_1 = arith.constant 0 : index
    %c0_2 = arith.constant 0 : index
    %1 = vector.load %arg2[%c0_1, %c0_2] : memref<64x256xf32, #tpu.memory_space<vmem>>, vector<64x256xf32>
    %cst = arith.constant dense<0.000000e+00> : vector<8x256xf32>
    %2 = tpu.matmul %0, %1, %cst {dimension_numbers = #tpu.dot_dimension_numbers<[1], [0], [0], [1], [0, 0, 1, 1], [], []>} : vector<8x64xf32>, vector<64x256xf32>, vector<8x256xf32> -> vector<8x256xf32>
    %c0_3 = arith.constant 0 : index
    %c0_4 = arith.constant 0 : index
    %3 = vector.load %arg3[%c0_3, %c0_4] : memref<1x256xf32, #tpu.memory_space<vmem>>, vector<1x256xf32>
    %4 = vector.broadcast %3 : vector<1x256xf32> to vector<8x256xf32>
    %5 = arith.addf %2, %4 : vector<8x256xf32>
    %c0_5 = arith.constant 0 : index
    %c0_6 = arith.constant 0 : index
    %6 = vector.load %arg4[%c0_5, %c0_6] : memref<8x256xf32, #tpu.memory_space<vmem>>, vector<8x256xf32>
    tpu.vector_store %arg4[%c0_5, %c0_6], %5 {strides = array<i32>} : memref<8x256xf32, #tpu.memory_space<vmem>>, vector<8x256xf32>,
    return
  }
  func.func @transform_0(%arg0: i32) -> (i32, i32) {
    %c0_i32 = arith.constant 0 : i32
    %c0_i32_0 = arith.constant 0 : i32
    return %arg0, %c0_i32 : i32, i32
  }
  func.func @transform_1(%arg0: i32) -> (i32, i32) {
    %c0_i32 = arith.constant 0 : i32
    %c0_i32_0 = arith.constant 0 : i32
    %c0_i32_1 = arith.constant 0 : i32
    return %c0_i32, %c0_i32_0 : i32, i32
  }
  func.func @transform_2(%arg0: i32) -> (i32, i32) {
    %c0_i32 = arith.constant 0 : i32
    %c0_i32_0 = arith.constant 0 : i32
    %c0_i32_1 = arith.constant 0 : i32
    return %c0_i32, %c0_i32_0 : i32, i32
  }
  func.func @transform_3(%arg0: i32) -> (i32, i32) {
    %c0_i32 = arith.constant 0 : i32
    %c0_i32_0 = arith.constant 0 : i32
    return %arg0, %c0_i32 : i32, i32
  }
}

</mosaic_0001>

<llo_original>
// kernel: nn_action_forward.1
$region0: #{nn_action_forward.1}
  #allocation0 [shape = 'u32[]', space=smem, size = 0x4, offset = 0x4, fixed_abs, tag = 'smem constant byte address 0x4 - core index']
  #allocation1 [shape = 'u32[144,128]{1,0:T(1,128)}', space=vmem, size = 0x12000, scoped, tag = 'internal scratch']
  %s0 = inlined_call_operand.vmem [shape: f32[8,64], index: 0, kind: input, shape index: {}]
  %s1 = inlined_call_operand.hbm [shape: f32[64,256], index: 1, kind: input, shape index: {}]
  %s2 = inlined_call_operand.vmem [shape: f32[1,256], index: 2, kind: input, shape index: {}]
  %s3 = inlined_call_operand.vmem [shape: f32[8,256], index: 3, kind: output, shape index: {}]
  %s4 = sld [smem:[#allocation0]]
  $region26: #{nn_action_forward.1} parent=0
    _
  %s6 = ssub.s32 1, %s4
  %s7 = scalar_select 0, %s6, %s4
  $region1: #{nn_action_forward.1} parent=0
    #allocation2 [shape = 'u8[65536]{0}', space=vmem, size = 0x10000, scoped, tag = 'input window, operand 1, single buffered']
    #allocation3 [shape = 's32[1]{0}', space=sflag, size = 0x4, scoped, tag = 'scoped memory for nn_action_forward.1']
    %8 = vsyncpa [#allocation3], 0
    // Predicated region
    $region2: #{nn_action_forward.1} parent=1 // pred_check
      _
    $region3: #{nn_action_forward.1} parent=1 // pred_check_branch
      %10 = sbr.rel (0) target = $region5
    $region4: #{nn_action_forward.1} parent=1 // pred_region
      _
    $region5: #{nn_action_forward.1} parent=1 // pred_fallthru
      _
    // Predicated region
    $region6: #{nn_action_forward.1} parent=1 // pred_check
      _
    $region7: #{nn_action_forward.1} parent=1 // pred_check_branch
      %12 = sbr.rel (0) target = $region9
    $region8: #{nn_action_forward.1} parent=1 // pred_region
      %s14 = ssub.s32 2048, 2048
      %15 = vsyncadd [#allocation3], %s14
      %s16 = sshll.u32 [#allocation2], 4
      %s17 = int_to_ptr.vmem [resolvable:$true] %s16
      %22 = dma.hbm_to_vmem [thread:$0]  %s1, 2048, %s17, [#allocation3], 256, 256, 16
    $region9: #{nn_action_forward.1} parent=1 // pred_fallthru
      _
    // Predicated region
    $region10: #{nn_action_forward.1} parent=1 // pred_check
      _
    $region11: #{nn_action_forward.1} parent=1 // pred_check_branch
      %24 = sbr.rel (0) target = $region13
    $region12: #{nn_action_forward.1} parent=1 // pred_region
      _
    $region13: #{nn_action_forward.1} parent=1 // pred_fallthru
      _
    // Predicated region
    $region14: #{nn_action_forward.1} parent=1 // pred_check
      _
    $region15: #{nn_action_forward.1} parent=1 // pred_check_branch
      %26 = sbr.rel (0) target = $region17
    $region16: #{nn_action_forward.1} parent=1 // pred_region
      %27 = dma.done [#allocation3], 2048
    $region17: #{nn_action_forward.1} parent=1 // pred_fallthru
      _
    %v28 = vld [vmem:[%s0] sm:$0xff]
    %v29 = vld [vmem:[#allocation2] sm:$0xff]
    %v30 = vld [vmem:[#allocation2 + $0x8] sm:$0xff]
    %v31 = vld [vmem:[#allocation2 + $0x10] sm:$0xff]
    %v32 = vld [vmem:[#allocation2 + $0x18] sm:$0xff]
    %v33 = vld [vmem:[#allocation2 + $0x20] sm:$0xff]
    %v34 = vld [vmem:[#allocation2 + $0x28] sm:$0xff]
    %v35 = vld [vmem:[#allocation2 + $0x30] sm:$0xff]
    %v36 = vld [vmem:[#allocation2 + $0x38] sm:$0xff]
    %v37 = vld [vmem:[#allocation2 + $0x40] sm:$0xff]
    %v38 = vld [vmem:[#allocation2 + $0x48] sm:$0xff]
    %v39 = vld [vmem:[#allocation2 + $0x50] sm:$0xff]
    %v40 = vld [vmem:[#allocation2 + $0x58] sm:$0xff]
    %v41 = vld [vmem:[#allocation2 + $0x60] sm:$0xff]
    %v42 = vld [vmem:[#allocation2 + $0x68] sm:$0xff]
    %v43 = vld [vmem:[#allocation2 + $0x70] sm:$0xff]
    %v44 = vld [vmem:[#allocation2 + $0x78] sm:$0xff]
    %v45 = vld [vmem:[%s2] sm:$0x3]
    %v47 = vlaneseq
    %v48 = vshrl.u32 %v47, 7
    %v49 = vsub.s32 0, %v48
    %v50 = vrot.slane %v45, %v49
    %v51 = vlaneseq
    %v52 = vshrl.u32 %v51, 7
    %v53 = vsub.s32 1, %v52
    %v54 = vrot.slane %v45, %v53
    %vm57 = vcmask 523264
    %v59 = vsel %vm57, %v28, 0
    %61 = vmatprep.subr.mxu0 %v30
    %62 = vmatpush1.msra.mxu0 %v29
    %63 = vmatprep.subr.mxu0 %v32
    %64 = vmatpush1.msra.mxu0 %v31
    %65 = vmatprep.subr.mxu0 %v34
    %66 = vmatpush1.msra.mxu0 %v33
    %67 = vmatprep.subr.mxu0 %v36
    %68 = vmatpush1.msra.mxu0 %v35
    %69 = vmatprep.subr.mxu0 %v38
    %70 = vmatpush1.msra.mxu0 %v37
    %71 = vmatprep.subr.mxu0 %v40
    %72 = vmatpush1.msra.mxu0 %v39
    %73 = vmatprep.subr.mxu0 %v42
    %74 = vmatpush1.msra.mxu0 %v41
    %75 = vmatprep.subr.mxu0 %v44
    %76 = vmatpush1.msra.mxu0 %v43
    %77 = vmatprep.subr.mxu0 0.0
    %78 = vmatpush1.msra.mxu0 0.0
    %79 = vmatprep.subr.mxu0 0.0
    %80 = vmatpush1.msra.mxu0 0.0
    %81 = vmatprep.subr.mxu0 0.0
    %82 = vmatpush1.msra.mxu0 0.0
    %83 = vmatprep.subr.mxu0 0.0
    %84 = vmatpush1.msra.mxu0 0.0
    %85 = vmatprep.subr.mxu0 0.0
    %86 = vmatpush1.msra.mxu0 0.0
    %87 = vmatprep.subr.mxu0 0.0
    %88 = vmatpush1.msra.mxu0 0.0
    %89 = vmatprep.subr.mxu0 0.0
    %90 = vmatpush1.msra.mxu0 0.0
    %91 = vmatprep.subr.mxu0 0.0
    %92 = vmatpush1.msra.mxu0 0.0
    %93 = vmatprep.subr.mxu0 0.0
    %94 = vmatpush1.msra.mxu0 0.0
    %95 = vmatprep.subr.mxu0 0.0
    %96 = vmatpush1.msra.mxu0 0.0
    %97 = vmatprep.subr.mxu0 0.0
    %98 = vmatpush1.msra.mxu0 0.0
    %99 = vmatprep.subr.mxu0 0.0
    %100 = vmatpush1.msra.mxu0 0.0
    %101 = vmatprep.subr.mxu0 0.0
    %102 = vmatpush1.msra.mxu0 0.0
    %103 = vmatprep.subr.mxu0 0.0
    %104 = vmatpush1.msra.mxu0 0.0
    %105 = vmatprep.subr.mxu0 0.0
    %106 = vmatpush1.msra.mxu0 0.0
    %107 = vmatprep.subr.mxu0 0.0
    %108 = vmatpush1.msra.mxu0 0.0
    %109 = vmatprep.subr.mxu0 0.0
    %110 = vmatpush1.msra.mxu0 0.0
    %111 = vmatprep.subr.mxu0 0.0
    %112 = vmatpush1.msra.mxu0 0.0
    %113 = vmatprep.subr.mxu0 0.0
    %114 = vmatpush1.msra.mxu0 0.0
    %115 = vmatprep.subr.mxu0 0.0
    %116 = vmatpush1.msra.mxu0 0.0
    %117 = vmatprep.subr.mxu0 0.0
    %118 = vmatpush1.msra.mxu0 0.0
    %119 = vmatprep.subr.mxu0 0.0
    %120 = vmatpush1.msra.mxu0 0.0
    %121 = vmatprep.subr.mxu0 0.0
    %122 = vmatpush1.msra.mxu0 0.0
    %123 = vmatprep.subr.mxu0 0.0
    %124 = vmatpush1.msra.mxu0 0.0
    %125 = vmatprep.mubr.f32.mxu0 0.0
    %126 = vmatmul.mubr.f32.gmra.mrb[0].mxu0 %v59
    %v127 = vpop.f32.mrb[0].mxu0
    %v128 = vadd.f32 %v50, %v127
    %v129 = vpop.f32.mrb[0].mxu0
    %v130 = vadd.f32 %v54, %v129
    %131 = vdwg.mxu0
    %132 = vst [vmem:[%s3] sm:$0xff] %v128
    %133 = vst [vmem:[%s3 + $0x8] sm:$0xff] %v130
    // Predicated region
    $region18: #{nn_action_forward.1} parent=1 // pred_check
      _
    $region19: #{nn_action_forward.1} parent=1 // pred_check_branch
      %135 = sbr.rel (0) target = $region21
    $region20: #{nn_action_forward.1} parent=1 // pred_region
      _
    $region21: #{nn_action_forward.1} parent=1 // pred_fallthru
      _
    // Predicated region
    $region22: #{nn_action_forward.1} parent=1 // pred_check
      _
    $region23: #{nn_action_forward.1} parent=1 // pred_check_branch
      %137 = sbr.rel (0) target = $region25
    $region24: #{nn_action_forward.1} parent=1 // pred_region
      _
    $region25: #{nn_action_forward.1} parent=1 // pred_fallthru
      _
    %138 = vsyncpa [#allocation3], 1

</llo_original>
